<compile_context>
chip_gen: v7x
topology: tpu7x:2x2x1
jax: 0.10.0
libtpu: 0.0.40
codegen_flags: <defaults>
</compile_context>

<pallas_src>
import functools

import jax
import jax.numpy as jnp
from jax.experimental import pallas as pl
from jax.experimental.pallas import tpu as pltpu

HIDDEN_SIZE = 256
STATE_DIM = 8        # LunarLanderContinuous-v2 observation dim
ACTION_DIM = 2       # LunarLanderContinuous-v2 action dim
OUT_PAD = 128        # lane-dense packed output width (mu in [:2], value in [2])
FUSED_H = 2 * HIDDEN_SIZE   # 512
PAD_MULT = 256       # pad the batch to a multiple of this (not of the tile)


def _round_up(x, m):
    return pl.cdiv(x, m) * m


# ---------------------------------------------------------------------------
# Kernel
# ---------------------------------------------------------------------------
def actor_critic_kernel(s_ref, w1_ref, b1_ref, wa2_ref, ba2_ref,
                        wc2_ref, bc2_ref, wa3_ref, wc3_ref, b3_ref, out_ref):
    H = HIDDEN_SIZE
    x = s_ref[...].astype(jnp.bfloat16)                     # [TB, 8]

    # Fused layer 1: [TB, 8] @ [8, 512]; actor cols [:256], critic cols [256:].
    h = jnp.dot(x, w1_ref[...], preferred_element_type=jnp.float32) + b1_ref[...]
    h = jnp.maximum(h, 0.0).astype(jnp.bfloat16)            # [TB, 512]

    # De-fused layer 2: two dense [256, 256] GEMMs (no structural zeros).
    # The 256-column halves of h are lane-tile aligned (2 x 128 lanes).
    ha = jnp.dot(h[:, :H], wa2_ref[...],
                 preferred_element_type=jnp.float32) + ba2_ref[...]
    hc = jnp.dot(h[:, H:], wc2_ref[...],
                 preferred_element_type=jnp.float32) + bc2_ref[...]
    ha = jnp.maximum(ha, 0.0).astype(jnp.bfloat16)          # [TB, 256]
    hc = jnp.maximum(hc, 0.0).astype(jnp.bfloat16)          # [TB, 256]

    # Layer 3: two [256, 128] dots summed into one lane-dense packed slab.
    out = jnp.dot(ha, wa3_ref[...], preferred_element_type=jnp.float32)
    out = out + jnp.dot(hc, wc3_ref[...], preferred_element_type=jnp.float32)
    # TODO(synk): optional bf16 writeback (halves HBM store traffic, matters on
    # v7x) once critic-value precision is validated against the training loop.
    out_ref[...] = (out + b3_ref[...]).astype(out_ref.dtype)


# ---------------------------------------------------------------------------
# Tiling / resource policy
# ---------------------------------------------------------------------------
def _select_tiling(B, block_b):
    """Pick (B_pad, TB).

    Pad the batch to a fixed modest multiple (PAD_MULT), not to TB, so padding
    waste is bounded.  Small batches run as a single tile.  Large batches get
    >= 4 grid steps (v7x megacore sharding + writeback overlap) with TB clamped
    to [PAD_MULT, block_b] and forced to divide B_pad.
    """
    B8 = int(_round_up(B, 8))            # f32 sublane alignment
    if B8 <= PAD_MULT:
        return B8, B8                    # single small tile, grid == (1,)
    B_pad = int(_round_up(B, PAD_MULT))
    tb = max(PAD_MULT, min(int(block_b), B_pad // 4))
    tb = (tb // PAD_MULT) * PAD_MULT
    while B_pad % tb != 0:               # PAD_MULT always divides B_pad
        tb -= PAD_MULT
    return B_pad, tb


def _vmem_limit_bytes(TB):
    """Rough per-step VMEM working-set estimate (bytes), with headroom.

    Includes the lane-padded [TB, 8] f32 state tile (8/128 lanes used -> full
    128-lane footprint), double-buffered in/out blocks, f32+bf16 activation
    copies, and double-buffered resident bf16 weights.  Clamped to a range that
    is safe on v5e/v6e defaults and v7x's 64 MiB physical VMEM.
    """
    weight_bytes = 2 * 2 * (STATE_DIM * FUSED_H            # w1
                            + 2 * HIDDEN_SIZE * HIDDEN_SIZE   # wa2 + wc2
                            + 2 * HIDDEN_SIZE * OUT_PAD)      # wa3 + wc3
    bias_bytes = 2 * 4 * (FUSED_H + 2 * HIDDEN_SIZE + OUT_PAD)
    per_row = (2 * 128 * 4              # state in (lane-padded f32), 2 buffers
               + 2 * OUT_PAD * 4        # packed out, 2 buffers
               + FUSED_H * (4 + 2)      # h f32 + bf16
               + 2 * HIDDEN_SIZE * (4 + 2)   # ha/hc f32 + bf16
               + OUT_PAD * 4)           # layer-3 accumulator
    est = weight_bytes + bias_bytes + TB * per_row
    return int(min(max(int(est * 1.5), 32 * 1024 * 1024), 48 * 1024 * 1024))


# ---------------------------------------------------------------------------
# Wrappers
# ---------------------------------------------------------------------------
def _forward_packed_impl(state, packed_params, block_b):
    """Returns the packed [B_pad, OUT_PAD] f32 slab."""
    B = state.shape[0]
    B_pad, TB = _select_tiling(B, block_b)
    if B_pad != B:
        state = jnp.pad(state, ((0, B_pad - B), (0, 0)))

    w1, b1, wa2, ba2, wc2, bc2, wa3, wc3, b3 = packed_params
    grid = (B_pad // TB,)
    const2 = lambda i: (0, 0)

    flops = 2 * B_pad * (STATE_DIM * FUSED_H
                         + 2 * HIDDEN_SIZE * HIDDEN_SIZE
                         + 2 * HIDDEN_SIZE * OUT_PAD)
    bytes_accessed = (
        (w1.size + wa2.size + wc2.size + wa3.size + wc3.size) * 2   # bf16 weights
        + (b1.size + ba2.size + bc2.size + b3.size) * 4             # f32 biases
        + B_pad * (STATE_DIM + OUT_PAD) * 4)                        # state + out

    out = pl.pallas_call(
        actor_critic_kernel,
        out_shape=jax.ShapeDtypeStruct((B_pad, OUT_PAD), jnp.float32),
        grid_spec=pltpu.PrefetchScalarGridSpec(
            num_scalar_prefetch=0,
            grid=grid,
            in_specs=[
                pl.BlockSpec((TB, STATE_DIM), lambda i: (i, 0)),
                pl.BlockSpec(w1.shape, const2),    # resident across the grid
                pl.BlockSpec(b1.shape, const2),
                pl.BlockSpec(wa2.shape, const2),
                pl.BlockSpec(ba2.shape, const2),
                pl.BlockSpec(wc2.shape, const2),
                pl.BlockSpec(bc2.shape, const2),
                pl.BlockSpec(wa3.shape, const2),
                pl.BlockSpec(wc3.shape, const2),
                pl.BlockSpec(b3.shape, const2),
            ],
            out_specs=pl.BlockSpec((TB, OUT_PAD), lambda i: (i, 0)),
        ),
        compiler_params=pltpu.CompilerParams(
            dimension_semantics=("parallel",),
            vmem_limit_bytes=_vmem_limit_bytes(TB)),
        cost_estimate=pl.CostEstimate(flops=flops, transcendentals=0,
                                      bytes_accessed=bytes_accessed),
    )(state, w1, b1, wa2, ba2, wc2, bc2, wa3, wc3, b3)
    return out


@functools.partial(jax.jit, static_argnames=("block_b",))
def actor_critic_forward_packed(state, packed_params, *, block_b=2048):
    """Packed output: [B, 128] f32 slab; mu = [:, :2], value = [:, 2:3].

    Preferred entry point for consumers that fuse the slicing into their next
    op (avoids an extra HBM pass over the slab).
    """
    out = _forward_packed_impl(state, packed_params, block_b)
    return out[: state.shape[0]]


@functools.partial(jax.jit, static_argnames=("block_b",))
def actor_critic_forward(state, packed_params, *, block_b=2048):
    """Module-equivalent forward: state [B, 8] f32 -> (mu [B, 2], value [B, 1])."""
    out = _forward_packed_impl(state, packed_params, block_b)
    B = state.shape[0]
    return out[:B, :ACTION_DIM], out[:B, ACTION_DIM:ACTION_DIM + 1]


# ---------------------------------------------------------------------------
# Parameter construction (Xavier-uniform weights, zero biases, as in PyTorch).
# ---------------------------------------------------------------------------
def xavier_uniform(key, fan_in, fan_out):
    bound = jnp.sqrt(6.0 / (fan_in + fan_out))
    return jax.random.uniform(key, (fan_in, fan_out), jnp.float32, -bound, bound)


def init_raw_params(key):
    ks = jax.random.split(key, 6)
    wa1 = xavier_uniform(ks[0], STATE_DIM, HIDDEN_SIZE)
    wa2 = xavier_uniform(ks[1], HIDDEN_SIZE, HIDDEN_SIZE)
    wa3 = xavier_uniform(ks[2], HIDDEN_SIZE, ACTION_DIM)
    ba1 = jnp.zeros((1, HIDDEN_SIZE), jnp.float32)
    ba2 = jnp.zeros((1, HIDDEN_SIZE), jnp.float32)
    ba3 = jnp.zeros((1, ACTION_DIM), jnp.float32)
    wc1 = xavier_uniform(ks[3], STATE_DIM, HIDDEN_SIZE)
    wc2 = xavier_uniform(ks[4], HIDDEN_SIZE, HIDDEN_SIZE)
    wc3 = xavier_uniform(ks[5], HIDDEN_SIZE, 1)
    bc1 = jnp.zeros((1, HIDDEN_SIZE), jnp.float32)
    bc2 = jnp.zeros((1, HIDDEN_SIZE), jnp.float32)
    bc3 = jnp.zeros((1, 1), jnp.float32)
    # The module's log_std parameter is unused by forward() -> not packed.
    return (wa1, ba1, wa2, ba2, wa3, ba3, wc1, bc1, wc2, bc2, wc3, bc3)


def pack_params(raw):
    """Pack per-layer weights for the kernel.

    Layer 1 fused to [8, 512]; layer 2 kept as two dense [256, 256] halves
    (no block-diagonal zero padding); layer 3 as two zero-padded [256, 128]
    halves feeding the lane-dense packed output (cols [0:2]=mu, col [2]=value).
    """
    (wa1, ba1, wa2, ba2, wa3, ba3, wc1, bc1, wc2, bc2, wc3, bc3) = raw
    H = HIDDEN_SIZE
    # layer 1: [8, 512]
    w1 = jnp.concatenate([wa1, wc1], axis=1).astype(jnp.bfloat16)
    b1 = jnp.concatenate([ba1, bc1], axis=1)
    # layer 2: two dense [256, 256] halves
    wa2b = wa2.astype(jnp.bfloat16)
    wc2b = wc2.astype(jnp.bfloat16)
    # layer 3: zero-padded [256, 128] halves
    wa3p = jnp.zeros((H, OUT_PAD), jnp.float32)
    wa3p = wa3p.at[:, :ACTION_DIM].set(wa3).astype(jnp.bfloat16)
    wc3p = jnp.zeros((H, OUT_PAD), jnp.float32)
    wc3p = wc3p.at[:, ACTION_DIM:ACTION_DIM + 1].set(wc3).astype(jnp.bfloat16)
    b3 = jnp.zeros((1, OUT_PAD), jnp.float32)
    b3 = b3.at[:, :ACTION_DIM].set(ba3)
    b3 = b3.at[:, ACTION_DIM:ACTION_DIM + 1].set(bc3)
    return (w1, b1, wa2b, ba2, wc2b, bc2, wa3p, wc3p, b3)


def reference_forward(state, raw):
    """Pure-JAX reference with the same quantization as the kernel:
    weights AND the activations feeding each matmul are rounded to bf16,
    bias-add / ReLU / accumulation stay f32."""
    (wa1, ba1, wa2, ba2, wa3, ba3, wc1, bc1, wc2, bc2, wc3, bc3) = raw
    bf = lambda a: a.astype(jnp.bfloat16).astype(jnp.float32)
    h = jnp.maximum(bf(state) @ bf(wa1) + ba1, 0.0)
    h = jnp.maximum(bf(h) @ bf(wa2) + ba2, 0.0)
    mu = bf(h) @ bf(wa3) + ba3
    g = jnp.maximum(bf(state) @ bf(wc1) + bc1, 0.0)
    g = jnp.maximum(bf(g) @ bf(wc2) + bc2, 0.0)
    v = bf(g) @ bf(wc3) + bc3
    return mu, v


if __name__ == "__main__":
    key = jax.random.PRNGKey(0)
    k_param, k_state = jax.random.split(key)
    raw_params = init_raw_params(k_param)
    packed = pack_params(raw_params)

    B = 8
    state = jax.random.normal(k_state, (B, STATE_DIM), jnp.float32)

    mu, value = jax.block_until_ready(actor_critic_forward(state, packed))

    mu_ref, value_ref = reference_forward(state, raw_params)
    assert mu.shape == (B, ACTION_DIM) and value.shape == (B, 1)
    # bf16 weights/activations at the MXU -> loosened tolerance vs f32 math
    assert jnp.allclose(mu, mu_ref, atol=2e-2, rtol=2e-2)
    assert jnp.allclose(value, value_ref, atol=2e-2, rtol=2e-2)

    print("KERNEL_OK")
</pallas_src>

<mosaic_0001>
module attributes {stable_mosaic.version = 11 : i64} {
  func.func @actor_critic_kernel(%arg0: i32, %arg1: memref<8x8xf32, #tpu.memory_space<vmem>>, %arg2: memref<8x512xbf16, #tpu.memory_space<vmem>>, %arg3: memref<1x512xf32, #tpu.memory_space<vmem>>, %arg4: memref<256x256xbf16, #tpu.memory_space<vmem>>, %arg5: memref<1x256xf32, #tpu.memory_space<vmem>>, %arg6: memref<256x256xbf16, #tpu.memory_space<vmem>>, %arg7: memref<1x256xf32, #tpu.memory_space<vmem>>, %arg8: memref<256x128xbf16, #tpu.memory_space<vmem>>, %arg9: memref<256x128xbf16, #tpu.memory_space<vmem>>, %arg10: memref<1x128xf32, #tpu.memory_space<vmem>>, %arg11: memref<8x128xf32, #tpu.memory_space<vmem>>) attributes {dimension_semantics = [#tpu.dimension_semantics<parallel>], iteration_bounds = array<i64: 1>, scalar_prefetch = 0 : i64, scratch_operands = 0 : i64, tpu.core_type = #tpu.core_type<tc>, window_params = [{transform_indices = @transform_0, window_bounds = array<i64: 8, 8>}, {pipeline_mode = #tpu.pipeline_mode<synchronous>, transform_indices = @transform_1, window_bounds = array<i64: 8, 512>}, {pipeline_mode = #tpu.pipeline_mode<synchronous>, transform_indices = @transform_2, window_bounds = array<i64: 1, 512>}, {pipeline_mode = #tpu.pipeline_mode<synchronous>, transform_indices = @transform_3, window_bounds = array<i64: 256, 256>}, {pipeline_mode = #tpu.pipeline_mode<synchronous>, transform_indices = @transform_4, window_bounds = array<i64: 1, 256>}, {pipeline_mode = #tpu.pipeline_mode<synchronous>, transform_indices = @transform_5, window_bounds = array<i64: 256, 256>}, {pipeline_mode = #tpu.pipeline_mode<synchronous>, transform_indices = @transform_6, window_bounds = array<i64: 1, 256>}, {pipeline_mode = #tpu.pipeline_mode<synchronous>, transform_indices = @transform_7, window_bounds = array<i64: 256, 128>}, {pipeline_mode = #tpu.pipeline_mode<synchronous>, transform_indices = @transform_8, window_bounds = array<i64: 256, 128>}, {pipeline_mode = #tpu.pipeline_mode<synchronous>, transform_indices = @transform_9, window_bounds = array<i64: 1, 128>}, {transform_indices = @transform_10, window_bounds = array<i64: 8, 128>}]} {
    %c0 = arith.constant 0 : index
    %c0_0 = arith.constant 0 : index
    %0 = vector.load %arg1[%c0, %c0_0] : memref<8x8xf32, #tpu.memory_space<vmem>>, vector<8x8xf32>
    %1 = arith.truncf %0 : vector<8x8xf32> to vector<8x8xbf16>
    %c0_1 = arith.constant 0 : index
    %c0_2 = arith.constant 0 : index
    %2 = vector.load %arg2[%c0_1, %c0_2] : memref<8x512xbf16, #tpu.memory_space<vmem>>, vector<8x512xbf16>
    %cst = arith.constant dense<0.000000e+00> : vector<8x512xf32>
    %3 = tpu.matmul %1, %2, %cst {dimension_numbers = #tpu.dot_dimension_numbers<[1], [0], [0], [1], [0, 0, 1, 1], [], []>} : vector<8x8xbf16>, vector<8x512xbf16>, vector<8x512xf32> -> vector<8x512xf32>
    %c0_3 = arith.constant 0 : index
    %c0_4 = arith.constant 0 : index
    %4 = vector.load %arg3[%c0_3, %c0_4] : memref<1x512xf32, #tpu.memory_space<vmem>>, vector<1x512xf32>
    %5 = vector.broadcast %4 : vector<1x512xf32> to vector<8x512xf32>
    %6 = arith.addf %3, %5 : vector<8x512xf32>
    %cst_5 = arith.constant 0.000000e+00 : f32
    %7 = vector.broadcast %cst_5 : f32 to vector<8x512xf32>
    %8 = arith.maximumf %6, %7 : vector<8x512xf32>
    %9 = arith.truncf %8 : vector<8x512xf32> to vector<8x512xbf16>
    %10 = vector.extract_strided_slice %9 {offsets = [0, 0], sizes = [8, 256], strides = [1, 1]} : vector<8x512xbf16> to vector<8x256xbf16>
    %c0_6 = arith.constant 0 : index
    %c0_7 = arith.constant 0 : index
    %11 = vector.load %arg4[%c0_6, %c0_7] : memref<256x256xbf16, #tpu.memory_space<vmem>>, vector<256x256xbf16>
    %cst_8 = arith.constant dense<0.000000e+00> : vector<8x256xf32>
    %12 = tpu.matmul %10, %11, %cst_8 {dimension_numbers = #tpu.dot_dimension_numbers<[1], [0], [0], [1], [0, 0, 1, 1], [], []>} : vector<8x256xbf16>, vector<256x256xbf16>, vector<8x256xf32> -> vector<8x256xf32>
    %c0_9 = arith.constant 0 : index
    %c0_10 = arith.constant 0 : index
    %13 = vector.load %arg5[%c0_9, %c0_10] : memref<1x256xf32, #tpu.memory_space<vmem>>, vector<1x256xf32>
    %14 = vector.broadcast %13 : vector<1x256xf32> to vector<8x256xf32>
    %15 = arith.addf %12, %14 : vector<8x256xf32>
    %16 = vector.extract_strided_slice %9 {offsets = [0, 256], sizes = [8, 256], strides = [1, 1]} : vector<8x512xbf16> to vector<8x256xbf16>
    %c0_11 = arith.constant 0 : index
    %c0_12 = arith.constant 0 : index
    %17 = vector.load %arg6[%c0_11, %c0_12] : memref<256x256xbf16, #tpu.memory_space<vmem>>, vector<256x256xbf16>
    %cst_13 = arith.constant dense<0.000000e+00> : vector<8x256xf32>
    %18 = tpu.matmul %16, %17, %cst_13 {dimension_numbers = #tpu.dot_dimension_numbers<[1], [0], [0], [1], [0, 0, 1, 1], [], []>} : vector<8x256xbf16>, vector<256x256xbf16>, vector<8x256xf32> -> vector<8x256xf32>
    %c0_14 = arith.constant 0 : index
    %c0_15 = arith.constant 0 : index
    %19 = vector.load %arg7[%c0_14, %c0_15] : memref<1x256xf32, #tpu.memory_space<vmem>>, vector<1x256xf32>
    %20 = vector.broadcast %19 : vector<1x256xf32> to vector<8x256xf32>
    %21 = arith.addf %18, %20 : vector<8x256xf32>
    %cst_16 = arith.constant 0.000000e+00 : f32
    %22 = vector.broadcast %cst_16 : f32 to vector<8x256xf32>
    %23 = arith.maximumf %15, %22 : vector<8x256xf32>
    %24 = arith.truncf %23 : vector<8x256xf32> to vector<8x256xbf16>
    %cst_17 = arith.constant 0.000000e+00 : f32
    %25 = vector.broadcast %cst_17 : f32 to vector<8x256xf32>
    %26 = arith.maximumf %21, %25 : vector<8x256xf32>
    %27 = arith.truncf %26 : vector<8x256xf32> to vector<8x256xbf16>
    %c0_18 = arith.constant 0 : index
    %c0_19 = arith.constant 0 : index
    %28 = vector.load %arg8[%c0_18, %c0_19] : memref<256x128xbf16, #tpu.memory_space<vmem>>, vector<256x128xbf16>
    %cst_20 = arith.constant dense<0.000000e+00> : vector<8x128xf32>
    %29 = tpu.matmul %24, %28, %cst_20 {dimension_numbers = #tpu.dot_dimension_numbers<[1], [0], [0], [1], [0, 0, 1, 1], [], []>} : vector<8x256xbf16>, vector<256x128xbf16>, vector<8x128xf32> -> vector<8x128xf32>
    %c0_21 = arith.constant 0 : index
    %c0_22 = arith.constant 0 : index
    %30 = vector.load %arg9[%c0_21, %c0_22] : memref<256x128xbf16, #tpu.memory_space<vmem>>, vector<256x128xbf16>
    %cst_23 = arith.constant dense<0.000000e+00> : vector<8x128xf32>
    %31 = tpu.matmul %27, %30, %cst_23 {dimension_numbers = #tpu.dot_dimension_numbers<[1], [0], [0], [1], [0, 0, 1, 1], [], []>} : vector<8x256xbf16>, vector<256x128xbf16>, vector<8x128xf32> -> vector<8x128xf32>
    %32 = arith.addf %29, %31 : vector<8x128xf32>
    %c0_24 = arith.constant 0 : index
    %c0_25 = arith.constant 0 : index
    %33 = vector.load %arg10[%c0_24, %c0_25] : memref<1x128xf32, #tpu.memory_space<vmem>>, vector<1x128xf32>
    %34 = vector.broadcast %33 : vector<1x128xf32> to vector<8x128xf32>
    %35 = arith.addf %32, %34 : vector<8x128xf32>
    %c0_26 = arith.constant 0 : index
    %c0_27 = arith.constant 0 : index
    %36 = vector.load %arg11[%c0_26, %c0_27] : memref<8x128xf32, #tpu.memory_space<vmem>>, vector<8x128xf32>
    tpu.vector_store %arg11[%c0_26, %c0_27], %35 {strides = array<i32>} : memref<8x128xf32, #tpu.memory_space<vmem>>, vector<8x128xf32>,
    return
  }
  func.func @transform_0(%arg0: i32) -> (i32, i32) {
    %c0_i32 = arith.constant 0 : i32
    %c0_i32_0 = arith.constant 0 : i32
    return %arg0, %c0_i32 : i32, i32
  }
  func.func @transform_1(%arg0: i32) -> (i32, i32) {
    %c0_i32 = arith.constant 0 : i32
    %c0_i32_0 = arith.constant 0 : i32
    %c0_i32_1 = arith.constant 0 : i32
    return %c0_i32, %c0_i32_0 : i32, i32
  }
  func.func @transform_2(%arg0: i32) -> (i32, i32) {
    %c0_i32 = arith.constant 0 : i32
    %c0_i32_0 = arith.constant 0 : i32
    %c0_i32_1 = arith.constant 0 : i32
    return %c0_i32, %c0_i32_0 : i32, i32
  }
  func.func @transform_3(%arg0: i32) -> (i32, i32) {
    %c0_i32 = arith.constant 0 : i32
    %c0_i32_0 = arith.constant 0 : i32
    %c0_i32_1 = arith.constant 0 : i32
    return %c0_i32, %c0_i32_0 : i32, i32
  }
  func.func @transform_4(%arg0: i32) -> (i32, i32) {
    %c0_i32 = arith.constant 0 : i32
    %c0_i32_0 = arith.constant 0 : i32
    %c0_i32_1 = arith.constant 0 : i32
    return %c0_i32, %c0_i32_0 : i32, i32
  }
  func.func @transform_5(%arg0: i32) -> (i32, i32) {
    %c0_i32 = arith.constant 0 : i32
    %c0_i32_0 = arith.constant 0 : i32
    %c0_i32_1 = arith.constant 0 : i32
    return %c0_i32, %c0_i32_0 : i32, i32
  }
  func.func @transform_6(%arg0: i32) -> (i32, i32) {
    %c0_i32 = arith.constant 0 : i32
    %c0_i32_0 = arith.constant 0 : i32
    %c0_i32_1 = arith.constant 0 : i32
    return %c0_i32, %c0_i32_0 : i32, i32
  }
  func.func @transform_7(%arg0: i32) -> (i32, i32) {
    %c0_i32 = arith.constant 0 : i32
    %c0_i32_0 = arith.constant 0 : i32
    %c0_i32_1 = arith.constant 0 : i32
    return %c0_i32, %c0_i32_0 : i32, i32
  }
  func.func @transform_8(%arg0: i32) -> (i32, i32) {
    %c0_i32 = arith.constant 0 : i32
    %c0_i32_0 = arith.constant 0 : i32
    %c0_i32_1 = arith.constant 0 : i32
    return %c0_i32, %c0_i32_0 : i32, i32
  }
  func.func @transform_9(%arg0: i32) -> (i32, i32) {
    %c0_i32 = arith.constant 0 : i32
    %c0_i32_0 = arith.constant 0 : i32
    %c0_i32_1 = arith.constant 0 : i32
    return %c0_i32, %c0_i32_0 : i32, i32
  }
  func.func @transform_10(%arg0: i32) -> (i32, i32) {
    %c0_i32 = arith.constant 0 : i32
    %c0_i32_0 = arith.constant 0 : i32
    return %arg0, %c0_i32 : i32, i32
  }
}

</mosaic_0001>

<llo_original>
// kernel: actor_critic_forward.1
$region0: #{actor_critic_forward.1}
  #allocation0 [shape = 'u32[]', space=smem, size = 0x4, offset = 0x4, fixed_abs, tag = 'smem constant byte address 0x4 - core index']
  #allocation1 [shape = 'u32[144,128]{1,0:T(1,128)}', space=vmem, size = 0x12000, scoped, tag = 'internal scratch']
  %s0 = inlined_call_operand.hbm [shape: f32[8,8], index: 0, kind: input, shape index: {}]
  %s1 = inlined_call_operand.vmem [shape: bf16[8,512], index: 1, kind: input, shape index: {}]
  %s2 = inlined_call_operand.vmem [shape: f32[1,512], index: 2, kind: input, shape index: {}]
  %s3 = inlined_call_operand.hbm [shape: bf16[256,256], index: 3, kind: input, shape index: {}]
  %s4 = inlined_call_operand.vmem [shape: f32[1,256], index: 4, kind: input, shape index: {}]
  %s5 = inlined_call_operand.hbm [shape: bf16[256,256], index: 5, kind: input, shape index: {}]
  %s6 = inlined_call_operand.vmem [shape: f32[1,256], index: 6, kind: input, shape index: {}]
  %s7 = inlined_call_operand.hbm [shape: bf16[256,128], index: 7, kind: input, shape index: {}]
  %s8 = inlined_call_operand.hbm [shape: bf16[256,128], index: 8, kind: input, shape index: {}]
  %s9 = inlined_call_operand.vmem [shape: f32[1,128], index: 9, kind: input, shape index: {}]
  %s10 = inlined_call_operand.vmem [shape: f32[8,128], index: 10, kind: output, shape index: {}]
  %s11 = sld [smem:[#allocation0]]
  $region70: #{actor_critic_forward.1} parent=0
    _
  %s13 = ssub.s32 1, %s11
  %s14 = scalar_select 0, %s13, %s11
  $region1: #{actor_critic_forward.1} parent=0
    #allocation2 [shape = 'u8[4096]{0}', space=vmem, size = 0x1000, scoped, tag = 'input window, operand 0, single buffered']
    #allocation3 [shape = 's32[1]{0}', space=sflag, size = 0x4, scoped, tag = 'scoped memory for actor_critic_forward.1']
    #allocation4 [shape = 'u8[131072]{0}', space=vmem, size = 0x20000, scoped, tag = 'input window, operand 3, single buffered']
    #allocation5 [shape = 's32[1]{0}', space=sflag, size = 0x4, scoped, tag = 'scoped memory for actor_critic_forward.1']
    #allocation6 [shape = 'u8[131072]{0}', space=vmem, size = 0x20000, scoped, tag = 'input window, operand 5, single buffered']
    #allocation7 [shape = 'u8[65536]{0}', space=vmem, size = 0x10000, scoped, tag = 'input window, operand 7, single buffered']
    #allocation8 [shape = 's32[1]{0}', space=sflag, size = 0x4, scoped, tag = 'scoped memory for actor_critic_forward.1']
    #allocation9 [shape = 'u8[65536]{0}', space=vmem, size = 0x10000, scoped, tag = 'input window, operand 8, single buffered']
    %15 = vsyncpa [#allocation3], 0
    %16 = vsyncpa [#allocation5], 0
    %17 = vsyncpa [#allocation8], 0
    // Predicated region
    $region2: #{actor_critic_forward.1} parent=1 // pred_check
      _
    $region3: #{actor_critic_forward.1} parent=1 // pred_check_branch
      %19 = sbr.rel (0) target = $region5
    $region4: #{actor_critic_forward.1} parent=1 // pred_region
      %s21 = ssub.s32 128, 128
      %22 = vsyncadd [#allocation3], %s21
      %s24 = sshll.u32 [#allocation2], 4
      %s25 = int_to_ptr.vmem [resolvable:$true] %s24
      %27 = dma.hbm_to_vmem [thread:$0]  %s0, 128, %s25, [#allocation3]
    $region5: #{actor_critic_forward.1} parent=1 // pred_fallthru
      _
    // Predicated region
    $region6: #{actor_critic_forward.1} parent=1 // pred_check
      _
    $region7: #{actor_critic_forward.1} parent=1 // pred_check_branch
      %29 = sbr.rel (0) target = $region9
    $region8: #{actor_critic_forward.1} parent=1 // pred_region
      _
    $region9: #{actor_critic_forward.1} parent=1 // pred_fallthru
      _
    // Predicated region
    $region10: #{actor_critic_forward.1} parent=1 // pred_check
      _
    $region11: #{actor_critic_forward.1} parent=1 // pred_check_branch
      %31 = sbr.rel (0) target = $region13
    $region12: #{actor_critic_forward.1} parent=1 // pred_region
      _
    $region13: #{actor_critic_forward.1} parent=1 // pred_fallthru
      _
    // Predicated region
    $region14: #{actor_critic_forward.1} parent=1 // pred_check
      _
    $region15: #{actor_critic_forward.1} parent=1 // pred_check_branch
      %33 = sbr.rel (0) target = $region17
    $region16: #{actor_critic_forward.1} parent=1 // pred_region
      %s35 = ssub.s32 4096, 4096
      %36 = vsyncadd [#allocation5], %s35
      %s37 = sshll.u32 [#allocation4], 4
      %s38 = int_to_ptr.vmem [resolvable:$true] %s37
      %43 = dma.hbm_to_vmem [thread:$0]  %s3, 4096, %s38, [#allocation5], 128, 128, 8
    $region17: #{actor_critic_forward.1} parent=1 // pred_fallthru
      _
    // Predicated region
    $region18: #{actor_critic_forward.1} parent=1 // pred_check
      _
    $region19: #{actor_critic_forward.1} parent=1 // pred_check_branch
      %45 = sbr.rel (0) target = $region21
    $region20: #{actor_critic_forward.1} parent=1 // pred_region
      _
    $region21: #{actor_critic_forward.1} parent=1 // pred_fallthru
      _
    // Predicated region
    $region22: #{actor_critic_forward.1} parent=1 // pred_check
      _
    $region23: #{actor_critic_forward.1} parent=1 // pred_check_branch
      %47 = sbr.rel (0) target = $region25
    $region24: #{actor_critic_forward.1} parent=1 // pred_region
      %s49 = ssub.s32 4096, 4096
      %50 = vsyncadd [#allocation5], %s49
      %s51 = sshll.u32 [#allocation6], 4
      %s52 = int_to_ptr.vmem [resolvable:$true] %s51
      %57 = dma.hbm_to_vmem [thread:$0]  %s5, 4096, %s52, [#allocation5], 128, 128, 8
    $region25: #{actor_critic_forward.1} parent=1 // pred_fallthru
      _
    // Predicated region
    $region26: #{actor_critic_forward.1} parent=1 // pred_check
      _
    $region27: #{actor_critic_forward.1} parent=1 // pred_check_branch
      %59 = sbr.rel (0) target = $region29
    $region28: #{actor_critic_forward.1} parent=1 // pred_region
      _
    $region29: #{actor_critic_forward.1} parent=1 // pred_fallthru
      _
    // Predicated region
    $region30: #{actor_critic_forward.1} parent=1 // pred_check
      _
    $region31: #{actor_critic_forward.1} parent=1 // pred_check_branch
      %61 = sbr.rel (0) target = $region33
    $region32: #{actor_critic_forward.1} parent=1 // pred_region
      %s63 = ssub.s32 2048, 2048
      %64 = vsyncadd [#allocation8], %s63
      %s65 = sshll.u32 [#allocation7], 4
      %s66 = int_to_ptr.vmem [resolvable:$true] %s65
      %71 = dma.hbm_to_vmem [thread:$0]  %s7, 2048, %s66, [#allocation8], 64, 64, 4
    $region33: #{actor_critic_forward.1} parent=1 // pred_fallthru
      _
    // Predicated region
    $region34: #{actor_critic_forward.1} parent=1 // pred_check
      _
    $region35: #{actor_critic_forward.1} parent=1 // pred_check_branch
      %73 = sbr.rel (0) target = $region37
    $region36: #{actor_critic_forward.1} parent=1 // pred_region
      %s75 = ssub.s32 2048, 2048
      %76 = vsyncadd [#allocation8], %s75
      %s77 = sshll.u32 [#allocation9], 4
      %s78 = int_to_ptr.vmem [resolvable:$true] %s77
      %83 = dma.hbm_to_vmem [thread:$0]  %s8, 2048, %s78, [#allocation8], 64, 64, 4
    $region37: #{actor_critic_forward.1} parent=1 // pred_fallthru
      _
    // Predicated region
    $region38: #{actor_critic_forward.1} parent=1 // pred_check
      _
    $region39: #{actor_critic_forward.1} parent=1 // pred_check_branch
      %85 = sbr.rel (0) target = $region41
    $region40: #{actor_critic_forward.1} parent=1 // pred_region
      _
    $region41: #{actor_critic_forward.1} parent=1 // pred_fallthru
      _
    // Predicated region
    $region42: #{actor_critic_forward.1} parent=1 // pred_check
      _
    $region43: #{actor_critic_forward.1} parent=1 // pred_check_branch
      %87 = sbr.rel (0) target = $region45
    $region44: #{actor_critic_forward.1} parent=1 // pred_region
      %88 = dma.done [#allocation3], 128
    $region45: #{actor_critic_forward.1} parent=1 // pred_fallthru
      _
    // Predicated region
    $region46: #{actor_critic_forward.1} parent=1 // pred_check
      _
    $region47: #{actor_critic_forward.1} parent=1 // pred_check_branch
      %90 = sbr.rel (0) target = $region49
    $region48: #{actor_critic_forward.1} parent=1 // pred_region
      %91 = dma.done [#allocation5], 4096
    $region49: #{actor_critic_forward.1} parent=1 // pred_fallthru
      _
    // Predicated region
    $region50: #{actor_critic_forward.1} parent=1 // pred_check
      _
    $region51: #{actor_critic_forward.1} parent=1 // pred_check_branch
      %93 = sbr.rel (0) target = $region53
    $region52: #{actor_critic_forward.1} parent=1 // pred_region
      %94 = dma.done [#allocation5], 4096
    $region53: #{actor_critic_forward.1} parent=1 // pred_fallthru
      _
    // Predicated region
    $region54: #{actor_critic_forward.1} parent=1 // pred_check
      _
    $region55: #{actor_critic_forward.1} parent=1 // pred_check_branch
      %96 = sbr.rel (0) target = $region57
    $region56: #{actor_critic_forward.1} parent=1 // pred_region
      %97 = dma.done [#allocation8], 2048
    $region57: #{actor_critic_forward.1} parent=1 // pred_fallthru
      _
    // Predicated region
    $region58: #{actor_critic_forward.1} parent=1 // pred_check
      _
    $region59: #{actor_critic_forward.1} parent=1 // pred_check_branch
      %99 = sbr.rel (0) target = $region61
    $region60: #{actor_critic_forward.1} parent=1 // pred_region
      %100 = dma.done [#allocation8], 2048
    $region61: #{actor_critic_forward.1} parent=1 // pred_fallthru
      _
    %v102 = vld [vmem:[#allocation2] sm:$0xff]
    %v103 = vpack.c.bf16 %v102, %v102
    %v104 = vld [vmem:[%s1] sm:$0xff]
    %v105 = vld [vmem:[%s1 + $0x8] sm:$0xff]
    %v106 = vld [vmem:[%s2] sm:$0xf]
    %v108 = vlaneseq
    %v109 = vshrl.u32 %v108, 7
    %v110 = vsub.s32 0, %v109
    %v111 = vrot.slane %v106, %v110
    %v112 = vlaneseq
    %v113 = vshrl.u32 %v112, 7
    %v114 = vsub.s32 1, %v113
    %v115 = vrot.slane %v106, %v114
    %v116 = vlaneseq
    %v117 = vshrl.u32 %v116, 7
    %v118 = vsub.s32 2, %v117
    %v119 = vrot.slane %v106, %v118
    %v120 = vlaneseq
    %v121 = vshrl.u32 %v120, 7
    %v122 = vsub.s32 3, %v121
    %v123 = vrot.slane %v106, %v122
    %v130 = vunpack.c.l.b16 %v104
    %v131 = vunpack.c.h.b16 %v104
    %v132 = vunpack.c.l.b16 %v105
    %v133 = vunpack.c.h.b16 %v105
    %v134 = vpack.c.b16 %v130, %v130
    %v135 = vpack.c.b16 %v131, %v131
    %v136 = vpack.c.b16 %v132, %v132
    %v137 = vpack.c.b16 %v133, %v133
    %vm138 = vcmask 64512
    %v140 = vsel %vm138, %v103, 0
    %vm142 = vcmask 1043456
    %v144 = vsel %vm142, %v134, 0
    %v147 = vsel %vm142, %v135, 0
    %v150 = vsel %vm142, %v136, 0
    %v153 = vsel %vm142, %v137, 0
    %155 = vmatprep.subr.bf16.mxu0 %v147
    %156 = vmatpush1.bf16.msra.mxu0 %v144
    %157 = vmatprep.subr.bf16.mxu0 0
    %158 = vmatpush1.bf16.msra.mxu0 0
    %159 = vmatprep.subr.bf16.mxu0 0
    %160 = vmatpush1.bf16.msra.mxu0 0
    %161 = vmatprep.subr.bf16.mxu0 0
    %162 = vmatpush1.bf16.msra.mxu0 0
    %163 = vmatprep.subr.bf16.mxu0 0
    %164 = vmatpush1.bf16.msra.mxu0 0
    %165 = vmatprep.subr.bf16.mxu0 0
    %166 = vmatpush1.bf16.msra.mxu0 0
    %167 = vmatprep.subr.bf16.mxu0 0
    %168 = vmatpush1.bf16.msra.mxu0 0
    %169 = vmatprep.subr.bf16.mxu0 0
    %170 = vmatpush1.bf16.msra.mxu0 0
    %171 = vmatprep.subr.bf16.mxu0 0
    %172 = vmatpush1.bf16.msra.mxu0 0
    %173 = vmatprep.subr.bf16.mxu0 0
    %174 = vmatpush1.bf16.msra.mxu0 0
    %175 = vmatprep.subr.bf16.mxu0 0
    %176 = vmatpush1.bf16.msra.mxu0 0
    %177 = vmatprep.subr.bf16.mxu0 0
    %178 = vmatpush1.bf16.msra.mxu0 0
    %179 = vmatprep.subr.bf16.mxu0 0
    %180 = vmatpush1.bf16.msra.mxu0 0
    %181 = vmatprep.subr.bf16.mxu0 0
    %182 = vmatpush1.bf16.msra.mxu0 0
    %183 = vmatprep.subr.bf16.mxu0 0
    %184 = vmatpush1.bf16.msra.mxu0 0
    %185 = vmatprep.subr.bf16.mxu0 0
    %186 = vmatpush1.bf16.msra.mxu0 0
    %187 = vmatprep.mubr.bf16.mxu0 0
    %188 = vmatmul.mubr.bf16.gmra.mrb[0].mxu0 %v140
    %v189 = vpop.f32.mrb[0].mxu0
    %v190 = vadd.f32 %v111, %v189
    %v191 = vpop.f32.mrb[0].mxu0
    %v192 = vadd.f32 %v115, %v191
    %v193 = vpop.f32.mrb[0].mxu0
    %v194 = vpop.f32.mrb[0].mxu0
    %195 = vdwg.mxu0
    %196 = vmatprep.subr.bf16.mxu0 %v153
    %197 = vmatpush1.bf16.msra.mxu0 %v150
    %198 = vmatprep.subr.bf16.mxu0 0
    %199 = vmatpush1.bf16.msra.mxu0 0
    %200 = vmatprep.subr.bf16.mxu0 0
    %201 = vmatpush1.bf16.msra.mxu0 0
    %202 = vmatprep.subr.bf16.mxu0 0
    %203 = vmatpush1.bf16.msra.mxu0 0
    %204 = vmatprep.subr.bf16.mxu0 0
    %205 = vmatpush1.bf16.msra.mxu0 0
    %206 = vmatprep.subr.bf16.mxu0 0
    %207 = vmatpush1.bf16.msra.mxu0 0
    %208 = vmatprep.subr.bf16.mxu0 0
    %209 = vmatpush1.bf16.msra.mxu0 0
    %210 = vmatprep.subr.bf16.mxu0 0
    %211 = vmatpush1.bf16.msra.mxu0 0
    %212 = vmatprep.subr.bf16.mxu0 0
    %213 = vmatpush1.bf16.msra.mxu0 0
    %214 = vmatprep.subr.bf16.mxu0 0
    %215 = vmatpush1.bf16.msra.mxu0 0
    %216 = vmatprep.subr.bf16.mxu0 0
    %217 = vmatpush1.bf16.msra.mxu0 0
    %218 = vmatprep.subr.bf16.mxu0 0
    %219 = vmatpush1.bf16.msra.mxu0 0
    %220 = vmatprep.subr.bf16.mxu0 0
    %221 = vmatpush1.bf16.msra.mxu0 0
    %222 = vmatprep.subr.bf16.mxu0 0
    %223 = vmatpush1.bf16.msra.mxu0 0
    %224 = vmatprep.subr.bf16.mxu0 0
    %225 = vmatpush1.bf16.msra.mxu0 0
    %226 = vmatprep.subr.bf16.mxu0 0
    %227 = vmatpush1.bf16.msra.mxu0 0
    %228 = vmatprep.mubr.bf16.mxu0 0
    %229 = vmatmul.mubr.bf16.gmra.mrb[0].mxu0 %v140
    %v230 = vpop.f32.mrb[0].mxu0
    %v231 = vadd.f32 %v119, %v230
    %v232 = vpop.f32.mrb[0].mxu0
    %v233 = vadd.f32 %v123, %v232
    %v234 = vpop.f32.mrb[0].mxu0
    %v235 = vpop.f32.mrb[0].mxu0
    %236 = vdwg.mxu0
    %v237 = vmax.f32 %v190, 0.0
    %v238 = vmax.f32 %v192, 0.0
    %v239 = vmax.f32 %v231, 0.0
    %v240 = vmax.f32 %v233, 0.0
    %v241 = vpack.c.bf16 %v237, %v237
    %v242 = vpack.c.bf16 %v238, %v238
    %v243 = vpack.c.bf16 %v239, %v239
    %v244 = vpack.c.bf16 %v240, %v240
    %v245 = vld [vmem:[#allocation4] sm:$0xff]
    %v246 = vld [vmem:[#allocation4 + $0x8] sm:$0xff]
    %v247 = vld [vmem:[#allocation4 + $0x10] sm:$0xff]
    %v248 = vld [vmem:[#allocation4 + $0x18] sm:$0xff]
    %v249 = vld [vmem:[#allocation4 + $0x20] sm:$0xff]
    %v250 = vld [vmem:[#allocation4 + $0x28] sm:$0xff]
    %v251 = vld [vmem:[#allocation4 + $0x30] sm:$0xff]
    %v252 = vld [vmem:[#allocation4 + $0x38] sm:$0xff]
    %v253 = vld [vmem:[#allocation4 + $0x40] sm:$0xff]
    %v254 = vld [vmem:[#allocation4 + $0x48] sm:$0xff]
    %v255 = vld [vmem:[#allocation4 + $0x50] sm:$0xff]
    %v256 = vld [vmem:[#allocation4 + $0x58] sm:$0xff]
    %v257 = vld [vmem:[#allocation4 + $0x60] sm:$0xff]
    %v258 = vld [vmem:[#allocation4 + $0x68] sm:$0xff]
    %v259 = vld [vmem:[#allocation4 + $0x70] sm:$0xff]
    %v260 = vld [vmem:[#allocation4 + $0x78] sm:$0xff]
    %v261 = vld [vmem:[#allocation4 + $0x80] sm:$0xff]
    %v262 = vld [vmem:[#allocation4 + $0x88] sm:$0xff]
    %v263 = vld [vmem:[#allocation4 + $0x90] sm:$0xff]
    %v264 = vld [vmem:[#allocation4 + $0x98] sm:$0xff]
    %v265 = vld [vmem:[#allocation4 + $0xa0] sm:$0xff]
    %v266 = vld [vmem:[#allocation4 + $0xa8] sm:$0xff]
    %v267 = vld [vmem:[#allocation4 + $0xb0] sm:$0xff]
    %v268 = vld [vmem:[#allocation4 + $0xb8] sm:$0xff]
    %v269 = vld [vmem:[#allocation4 + $0xc0] sm:$0xff]
    %v270 = vld [vmem:[#allocation4 + $0xc8] sm:$0xff]
    %v271 = vld [vmem:[#allocation4 + $0xd0] sm:$0xff]
    %v272 = vld [vmem:[#allocation4 + $0xd8] sm:$0xff]
    %v273 = vld [vmem:[#allocation4 + $0xe0] sm:$0xff]
    %v274 = vld [vmem:[#allocation4 + $0xe8] sm:$0xff]
    %v275 = vld [vmem:[#allocation4 + $0xf0] sm:$0xff]
    %v276 = vld [vmem:[#allocation4 + $0xf8] sm:$0xff]
    %v277 = vld [vmem:[%s4] sm:$0x3]
    %v279 = vlaneseq
    %v280 = vshrl.u32 %v279, 7
    %v281 = vsub.s32 0, %v280
    %v282 = vrot.slane %v277, %v281
    %v283 = vlaneseq
    %v284 = vshrl.u32 %v283, 7
    %v285 = vsub.s32 1, %v284
    %v286 = vrot.slane %v277, %v285
    %v321 = vunpack.c.l.b16 %v245
    %v322 = vunpack.c.h.b16 %v245
    %v323 = vunpack.c.l.b16 %v246
    %v324 = vunpack.c.h.b16 %v246
    %v325 = vunpack.c.l.b16 %v247
    %v326 = vunpack.c.h.b16 %v247
    %v327 = vunpack.c.l.b16 %v248
    %v328 = vunpack.c.h.b16 %v248
    %v329 = vunpack.c.l.b16 %v249
    %v330 = vunpack.c.h.b16 %v249
    %v331 = vunpack.c.l.b16 %v250
    %v332 = vunpack.c.h.b16 %v250
    %v333 = vunpack.c.l.b16 %v251
    %v334 = vunpack.c.h.b16 %v251
    %v335 = vunpack.c.l.b16 %v252
    %v336 = vunpack.c.h.b16 %v252
    %v337 = vunpack.c.l.b16 %v253
    %v338 = vunpack.c.h.b16 %v253
    %v339 = vunpack.c.l.b16 %v254
    %v340 = vunpack.c.h.b16 %v254
    %v341 = vunpack.c.l.b16 %v255
    %v342 = vunpack.c.h.b16 %v255
    %v343 = vunpack.c.l.b16 %v256
    %v344 = vunpack.c.h.b16 %v256
    %v345 = vunpack.c.l.b16 %v257
    %v346 = vunpack.c.h.b16 %v257
    %v347 = vunpack.c.l.b16 %v258
    %v348 = vunpack.c.h.b16 %v258
    %v349 = vunpack.c.l.b16 %v259
    %v350 = vunpack.c.h.b16 %v259
    %v351 = vunpack.c.l.b16 %v260
    %v352 = vunpack.c.h.b16 %v260
    %v353 = vunpack.c.l.b16 %v261
    %v354 = vunpack.c.h.b16 %v261
    %v355 = vunpack.c.l.b16 %v262
    %v356 = vunpack.c.h.b16 %v262
    %v357 = vunpack.c.l.b16 %v263
    %v358 = vunpack.c.h.b16 %v263
    %v359 = vunpack.c.l.b16 %v264
    %v360 = vunpack.c.h.b16 %v264
    %v361 = vunpack.c.l.b16 %v265
    %v362 = vunpack.c.h.b16 %v265
    %v363 = vunpack.c.l.b16 %v266
    %v364 = vunpack.c.h.b16 %v266
    %v365 = vunpack.c.l.b16 %v267
    %v366 = vunpack.c.h.b16 %v267
    %v367 = vunpack.c.l.b16 %v268
    %v368 = vunpack.c.h.b16 %v268
    %v369 = vunpack.c.l.b16 %v269
    %v370 = vunpack.c.h.b16 %v269
    %v371 = vunpack.c.l.b16 %v270
    %v372 = vunpack.c.h.b16 %v270
    %v373 = vunpack.c.l.b16 %v271
    %v374 = vunpack.c.h.b16 %v271
    %v375 = vunpack.c.l.b16 %v272
    %v376 = vunpack.c.h.b16 %v272
    %v377 = vunpack.c.l.b16 %v273
    %v378 = vunpack.c.h.b16 %v273
    %v379 = vunpack.c.l.b16 %v274
    %v380 = vunpack.c.h.b16 %v274
    %v381 = vunpack.c.l.b16 %v275
    %v382 = vunpack.c.h.b16 %v275
    %v383 = vunpack.c.l.b16 %v276
    %v384 = vunpack.c.h.b16 %v276
    %v385 = vpack.c.b16 %v323, %v321
    %v386 = vpack.c.b16 %v324, %v322
    %v387 = vpack.c.b16 %v327, %v325
    %v388 = vpack.c.b16 %v328, %v326
    %v389 = vpack.c.b16 %v331, %v329
    %v390 = vpack.c.b16 %v332, %v330
    %v391 = vpack.c.b16 %v335, %v333
    %v392 = vpack.c.b16 %v336, %v334
    %v393 = vpack.c.b16 %v339, %v337
    %v394 = vpack.c.b16 %v340, %v338
    %v395 = vpack.c.b16 %v343, %v341
    %v396 = vpack.c.b16 %v344, %v342
    %v397 = vpack.c.b16 %v347, %v345
    %v398 = vpack.c.b16 %v348, %v346
    %v399 = vpack.c.b16 %v351, %v349
    %v400 = vpack.c.b16 %v352, %v350
    %v401 = vpack.c.b16 %v355, %v353
    %v402 = vpack.c.b16 %v356, %v354
    %v403 = vpack.c.b16 %v359, %v357
    %v404 = vpack.c.b16 %v360, %v358
    %v405 = vpack.c.b16 %v363, %v361
    %v406 = vpack.c.b16 %v364, %v362
    %v407 = vpack.c.b16 %v367, %v365
    %v408 = vpack.c.b16 %v368, %v366
    %v409 = vpack.c.b16 %v371, %v369
    %v410 = vpack.c.b16 %v372, %v370
    %v411 = vpack.c.b16 %v375, %v373
    %v412 = vpack.c.b16 %v376, %v374
    %v413 = vpack.c.b16 %v379, %v377
    %v414 = vpack.c.b16 %v380, %v378
    %v415 = vpack.c.b16 %v383, %v381
    %v416 = vpack.c.b16 %v384, %v382
    %449 = vmatprep.subr.bf16.mxu0 %v386
    %450 = vmatpush1.bf16.msra.mxu0 %v385
    %451 = vmatprep.subr.bf16.mxu0 %v388
    %452 = vmatpush1.bf16.msra.mxu0 %v387
    %453 = vmatprep.subr.bf16.mxu0 %v390
    %454 = vmatpush1.bf16.msra.mxu0 %v389
    %455 = vmatprep.subr.bf16.mxu0 %v392
    %456 = vmatpush1.bf16.msra.mxu0 %v391
    %457 = vmatprep.subr.bf16.mxu0 %v394
    %458 = vmatpush1.bf16.msra.mxu0 %v393
    %459 = vmatprep.subr.bf16.mxu0 %v396
    %460 = vmatpush1.bf16.msra.mxu0 %v395
    %461 = vmatprep.subr.bf16.mxu0 %v398
    %462 = vmatpush1.bf16.msra.mxu0 %v397
    %463 = vmatprep.subr.bf16.mxu0 %v400
    %464 = vmatpush1.bf16.msra.mxu0 %v399
    %465 = vmatprep.subr.bf16.mxu0 %v402
    %466 = vmatpush1.bf16.msra.mxu0 %v401
    %467 = vmatprep.subr.bf16.mxu0 %v404
    %468 = vmatpush1.bf16.msra.mxu0 %v403
    %469 = vmatprep.subr.bf16.mxu0 %v406
    %470 = vmatpush1.bf16.msra.mxu0 %v405
    %471 = vmatprep.subr.bf16.mxu0 %v408
    %472 = vmatpush1.bf16.msra.mxu0 %v407
    %473 = vmatprep.subr.bf16.mxu0 %v410
    %474 = vmatpush1.bf16.msra.mxu0 %v409
    %475 = vmatprep.subr.bf16.mxu0 %v412
    %476 = vmatpush1.bf16.msra.mxu0 %v411
    %477 = vmatprep.subr.bf16.mxu0 %v414
    %478 = vmatpush1.bf16.msra.mxu0 %v413
    %479 = vmatprep.subr.bf16.mxu0 %v416
    %480 = vmatpush1.bf16.msra.mxu0 %v415
    %481 = vmatprep.mubr.bf16.mxu0 %v242
    %482 = vmatmul.mubr.bf16.gmra.mrb[0].mxu0 %v241
    %v483 = vpop.f32.mrb[0].mxu0
    %v484 = vadd.f32 %v282, %v483
    %v485 = vpop.f32.mrb[0].mxu0
    %v486 = vadd.f32 %v286, %v485
    %v487 = vpop.f32.mrb[0].mxu0
    %v488 = vpop.f32.mrb[0].mxu0
    %489 = vdwg.mxu0
    %v490 = vld [vmem:[#allocation6] sm:$0xff]
    %v491 = vld [vmem:[#allocation6 + $0x8] sm:$0xff]
    %v492 = vld [vmem:[#allocation6 + $0x10] sm:$0xff]
    %v493 = vld [vmem:[#allocation6 + $0x18] sm:$0xff]
    %v494 = vld [vmem:[#allocation6 + $0x20] sm:$0xff]
    %v495 = vld [vmem:[#allocation6 + $0x28] sm:$0xff]
    %v496 = vld [vmem:[#allocation6 + $0x30] sm:$0xff]
    %v497 = vld [vmem:[#allocation6 + $0x38] sm:$0xff]
    %v498 = vld [vmem:[#allocation6 + $0x40] sm:$0xff]
    %v499 = vld [vmem:[#allocation6 + $0x48] sm:$0xff]
    %v500 = vld [vmem:[#allocation6 + $0x50] sm:$0xff]
    %v501 = vld [vmem:[#allocation6 + $0x58] sm:$0xff]
    %v502 = vld [vmem:[#allocation6 + $0x60] sm:$0xff]
    %v503 = vld [vmem:[#allocation6 + $0x68] sm:$0xff]
    %v504 = vld [vmem:[#allocation6 + $0x70] sm:$0xff]
    %v505 = vld [vmem:[#allocation6 + $0x78] sm:$0xff]
    %v506 = vld [vmem:[#allocation6 + $0x80] sm:$0xff]
    %v507 = vld [vmem:[#allocation6 + $0x88] sm:$0xff]
    %v508 = vld [vmem:[#allocation6 + $0x90] sm:$0xff]
    %v509 = vld [vmem:[#allocation6 + $0x98] sm:$0xff]
    %v510 = vld [vmem:[#allocation6 + $0xa0] sm:$0xff]
    %v511 = vld [vmem:[#allocation6 + $0xa8] sm:$0xff]
    %v512 = vld [vmem:[#allocation6 + $0xb0] sm:$0xff]
    %v513 = vld [vmem:[#allocation6 + $0xb8] sm:$0xff]
    %v514 = vld [vmem:[#allocation6 + $0xc0] sm:$0xff]
    %v515 = vld [vmem:[#allocation6 + $0xc8] sm:$0xff]
    %v516 = vld [vmem:[#allocation6 + $0xd0] sm:$0xff]
    %v517 = vld [vmem:[#allocation6 + $0xd8] sm:$0xff]
    %v518 = vld [vmem:[#allocation6 + $0xe0] sm:$0xff]
    %v519 = vld [vmem:[#allocation6 + $0xe8] sm:$0xff]
    %v520 = vld [vmem:[#allocation6 + $0xf0] sm:$0xff]
    %v521 = vld [vmem:[#allocation6 + $0xf8] sm:$0xff]
    %v522 = vld [vmem:[%s6] sm:$0x3]
    %v524 = vlaneseq
    %v525 = vshrl.u32 %v524, 7
    %v526 = vsub.s32 0, %v525
    %v527 = vrot.slane %v522, %v526
    %v528 = vlaneseq
    %v529 = vshrl.u32 %v528, 7
    %v530 = vsub.s32 1, %v529
    %v531 = vrot.slane %v522, %v530
    %v566 = vunpack.c.l.b16 %v490
    %v567 = vunpack.c.h.b16 %v490
    %v568 = vunpack.c.l.b16 %v491
    %v569 = vunpack.c.h.b16 %v491
    %v570 = vunpack.c.l.b16 %v492
    %v571 = vunpack.c.h.b16 %v492
    %v572 = vunpack.c.l.b16 %v493
    %v573 = vunpack.c.h.b16 %v493
    %v574 = vunpack.c.l.b16 %v494
    %v575 = vunpack.c.h.b16 %v494
    %v576 = vunpack.c.l.b16 %v495
    %v577 = vunpack.c.h.b16 %v495
    %v578 = vunpack.c.l.b16 %v496
    %v579 = vunpack.c.h.b16 %v496
    %v580 = vunpack.c.l.b16 %v497
    %v581 = vunpack.c.h.b16 %v497
    %v582 = vunpack.c.l.b16 %v498
    %v583 = vunpack.c.h.b16 %v498
    %v584 = vunpack.c.l.b16 %v499
    %v585 = vunpack.c.h.b16 %v499
    %v586 = vunpack.c.l.b16 %v500
    %v587 = vunpack.c.h.b16 %v500
    %v588 = vunpack.c.l.b16 %v501
    %v589 = vunpack.c.h.b16 %v501
    %v590 = vunpack.c.l.b16 %v502
    %v591 = vunpack.c.h.b16 %v502
    %v592 = vunpack.c.l.b16 %v503
    %v593 = vunpack.c.h.b16 %v503
    %v594 = vunpack.c.l.b16 %v504
    %v595 = vunpack.c.h.b16 %v504
    %v596 = vunpack.c.l.b16 %v505
    %v597 = vunpack.c.h.b16 %v505
    %v598 = vunpack.c.l.b16 %v506
    %v599 = vunpack.c.h.b16 %v506
    %v600 = vunpack.c.l.b16 %v507
    %v601 = vunpack.c.h.b16 %v507
    %v602 = vunpack.c.l.b16 %v508
    %v603 = vunpack.c.h.b16 %v508
    %v604 = vunpack.c.l.b16 %v509
    %v605 = vunpack.c.h.b16 %v509
    %v606 = vunpack.c.l.b16 %v510
    %v607 = vunpack.c.h.b16 %v510
    %v608 = vunpack.c.l.b16 %v511
    %v609 = vunpack.c.h.b16 %v511
    %v610 = vunpack.c.l.b16 %v512
    %v611 = vunpack.c.h.b16 %v512
    %v612 = vunpack.c.l.b16 %v513
    %v613 = vunpack.c.h.b16 %v513
    %v614 = vunpack.c.l.b16 %v514
    %v615 = vunpack.c.h.b16 %v514
    %v616 = vunpack.c.l.b16 %v515
    %v617 = vunpack.c.h.b16 %v515
    %v618 = vunpack.c.l.b16 %v516
    %v619 = vunpack.c.h.b16 %v516
    %v620 = vunpack.c.l.b16 %v517
    %v621 = vunpack.c.h.b16 %v517
    %v622 = vunpack.c.l.b16 %v518
    %v623 = vunpack.c.h.b16 %v518
    %v624 = vunpack.c.l.b16 %v519
    %v625 = vunpack.c.h.b16 %v519
    %v626 = vunpack.c.l.b16 %v520
    %v627 = vunpack.c.h.b16 %v520
    %v628 = vunpack.c.l.b16 %v521
    %v629 = vunpack.c.h.b16 %v521
    %v630 = vpack.c.b16 %v568, %v566
    %v631 = vpack.c.b16 %v569, %v567
    %v632 = vpack.c.b16 %v572, %v570
    %v633 = vpack.c.b16 %v573, %v571
    %v634 = vpack.c.b16 %v576, %v574
    %v635 = vpack.c.b16 %v577, %v575
    %v636 = vpack.c.b16 %v580, %v578
    %v637 = vpack.c.b16 %v581, %v579
    %v638 = vpack.c.b16 %v584, %v582
    %v639 = vpack.c.b16 %v585, %v583
    %v640 = vpack.c.b16 %v588, %v586
    %v641 = vpack.c.b16 %v589, %v587
    %v642 = vpack.c.b16 %v592, %v590
    %v643 = vpack.c.b16 %v593, %v591
    %v644 = vpack.c.b16 %v596, %v594
    %v645 = vpack.c.b16 %v597, %v595
    %v646 = vpack.c.b16 %v600, %v598
    %v647 = vpack.c.b16 %v601, %v599
    %v648 = vpack.c.b16 %v604, %v602
    %v649 = vpack.c.b16 %v605, %v603
    %v650 = vpack.c.b16 %v608, %v606
    %v651 = vpack.c.b16 %v609, %v607
    %v652 = vpack.c.b16 %v612, %v610
    %v653 = vpack.c.b16 %v613, %v611
    %v654 = vpack.c.b16 %v616, %v614
    %v655 = vpack.c.b16 %v617, %v615
    %v656 = vpack.c.b16 %v620, %v618
    %v657 = vpack.c.b16 %v621, %v619
    %v658 = vpack.c.b16 %v624, %v622
    %v659 = vpack.c.b16 %v625, %v623
    %v660 = vpack.c.b16 %v628, %v626
    %v661 = vpack.c.b16 %v629, %v627
    %694 = vmatprep.subr.bf16.mxu0 %v631
    %695 = vmatpush1.bf16.msra.mxu0 %v630
    %696 = vmatprep.subr.bf16.mxu0 %v633
    %697 = vmatpush1.bf16.msra.mxu0 %v632
    %698 = vmatprep.subr.bf16.mxu0 %v635
    %699 = vmatpush1.bf16.msra.mxu0 %v634
    %700 = vmatprep.subr.bf16.mxu0 %v637
    %701 = vmatpush1.bf16.msra.mxu0 %v636
    %702 = vmatprep.subr.bf16.mxu0 %v639
    %703 = vmatpush1.bf16.msra.mxu0 %v638
    %704 = vmatprep.subr.bf16.mxu0 %v641
    %705 = vmatpush1.bf16.msra.mxu0 %v640
    %706 = vmatprep.subr.bf16.mxu0 %v643
    %707 = vmatpush1.bf16.msra.mxu0 %v642
    %708 = vmatprep.subr.bf16.mxu0 %v645
    %709 = vmatpush1.bf16.msra.mxu0 %v644
    %710 = vmatprep.subr.bf16.mxu0 %v647
    %711 = vmatpush1.bf16.msra.mxu0 %v646
    %712 = vmatprep.subr.bf16.mxu0 %v649
    %713 = vmatpush1.bf16.msra.mxu0 %v648
    %714 = vmatprep.subr.bf16.mxu0 %v651
    %715 = vmatpush1.bf16.msra.mxu0 %v650
    %716 = vmatprep.subr.bf16.mxu0 %v653
    %717 = vmatpush1.bf16.msra.mxu0 %v652
    %718 = vmatprep.subr.bf16.mxu0 %v655
    %719 = vmatpush1.bf16.msra.mxu0 %v654
    %720 = vmatprep.subr.bf16.mxu0 %v657
    %721 = vmatpush1.bf16.msra.mxu0 %v656
    %722 = vmatprep.subr.bf16.mxu0 %v659
    %723 = vmatpush1.bf16.msra.mxu0 %v658
    %724 = vmatprep.subr.bf16.mxu0 %v661
    %725 = vmatpush1.bf16.msra.mxu0 %v660
    %726 = vmatprep.mubr.bf16.mxu0 %v244
    %727 = vmatmul.mubr.bf16.gmra.mrb[0].mxu0 %v243
    %v728 = vpop.f32.mrb[0].mxu0
    %v729 = vadd.f32 %v527, %v728
    %v730 = vpop.f32.mrb[0].mxu0
    %v731 = vadd.f32 %v531, %v730
    %v732 = vpop.f32.mrb[0].mxu0
    %v733 = vpop.f32.mrb[0].mxu0
    %734 = vdwg.mxu0
    %v735 = vmax.f32 %v484, 0.0
    %v736 = vmax.f32 %v486, 0.0
    %v737 = vpack.c.bf16 %v735, %v735
    %v738 = vpack.c.bf16 %v736, %v736
    %v739 = vmax.f32 %v729, 0.0
    %v740 = vmax.f32 %v731, 0.0
    %v741 = vpack.c.bf16 %v739, %v739
    %v742 = vpack.c.bf16 %v740, %v740
    %v743 = vld [vmem:[#allocation7] sm:$0xf]
    %v744 = vld [vmem:[#allocation7 + $0x4] sm:$0xf]
    %v745 = vld [vmem:[#allocation7 + $0x8] sm:$0xf]
    %v746 = vld [vmem:[#allocation7 + $0xc] sm:$0xf]
    %v747 = vld [vmem:[#allocation7 + $0x10] sm:$0xf]
    %v748 = vld [vmem:[#allocation7 + $0x14] sm:$0xf]
    %v749 = vld [vmem:[#allocation7 + $0x18] sm:$0xf]
    %v750 = vld [vmem:[#allocation7 + $0x1c] sm:$0xf]
    %v751 = vld [vmem:[#allocation7 + $0x20] sm:$0xf]
    %v752 = vld [vmem:[#allocation7 + $0x24] sm:$0xf]
    %v753 = vld [vmem:[#allocation7 + $0x28] sm:$0xf]
    %v754 = vld [vmem:[#allocation7 + $0x2c] sm:$0xf]
    %v755 = vld [vmem:[#allocation7 + $0x30] sm:$0xf]
    %v756 = vld [vmem:[#allocation7 + $0x34] sm:$0xf]
    %v757 = vld [vmem:[#allocation7 + $0x38] sm:$0xf]
    %v758 = vld [vmem:[#allocation7 + $0x3c] sm:$0xf]
    %v759 = vld [vmem:[#allocation7 + $0x40] sm:$0xf]
    %v760 = vld [vmem:[#allocation7 + $0x44] sm:$0xf]
    %v761 = vld [vmem:[#allocation7 + $0x48] sm:$0xf]
    %v762 = vld [vmem:[#allocation7 + $0x4c] sm:$0xf]
    %v763 = vld [vmem:[#allocation7 + $0x50] sm:$0xf]
    %v764 = vld [vmem:[#allocation7 + $0x54] sm:$0xf]
    %v765 = vld [vmem:[#allocation7 + $0x58] sm:$0xf]
    %v766 = vld [vmem:[#allocation7 + $0x5c] sm:$0xf]
    %v767 = vld [vmem:[#allocation7 + $0x60] sm:$0xf]
    %v768 = vld [vmem:[#allocation7 + $0x64] sm:$0xf]
    %v769 = vld [vmem:[#allocation7 + $0x68] sm:$0xf]
    %v770 = vld [vmem:[#allocation7 + $0x6c] sm:$0xf]
    %v771 = vld [vmem:[#allocation7 + $0x70] sm:$0xf]
    %v772 = vld [vmem:[#allocation7 + $0x74] sm:$0xf]
    %v773 = vld [vmem:[#allocation7 + $0x78] sm:$0xf]
    %v774 = vld [vmem:[#allocation7 + $0x7c] sm:$0xf]
    %v775 = vld [vmem:[#allocation9] sm:$0xf]
    %v776 = vld [vmem:[#allocation9 + $0x4] sm:$0xf]
    %v777 = vld [vmem:[#allocation9 + $0x8] sm:$0xf]
    %v778 = vld [vmem:[#allocation9 + $0xc] sm:$0xf]
    %v779 = vld [vmem:[#allocation9 + $0x10] sm:$0xf]
    %v780 = vld [vmem:[#allocation9 + $0x14] sm:$0xf]
    %v781 = vld [vmem:[#allocation9 + $0x18] sm:$0xf]
    %v782 = vld [vmem:[#allocation9 + $0x1c] sm:$0xf]
    %v783 = vld [vmem:[#allocation9 + $0x20] sm:$0xf]
    %v784 = vld [vmem:[#allocation9 + $0x24] sm:$0xf]
    %v785 = vld [vmem:[#allocation9 + $0x28] sm:$0xf]
    %v786 = vld [vmem:[#allocation9 + $0x2c] sm:$0xf]
    %v787 = vld [vmem:[#allocation9 + $0x30] sm:$0xf]
    %v788 = vld [vmem:[#allocation9 + $0x34] sm:$0xf]
    %v789 = vld [vmem:[#allocation9 + $0x38] sm:$0xf]
    %v790 = vld [vmem:[#allocation9 + $0x3c] sm:$0xf]
    %v791 = vld [vmem:[#allocation9 + $0x40] sm:$0xf]
    %v792 = vld [vmem:[#allocation9 + $0x44] sm:$0xf]
    %v793 = vld [vmem:[#allocation9 + $0x48] sm:$0xf]
    %v794 = vld [vmem:[#allocation9 + $0x4c] sm:$0xf]
    %v795 = vld [vmem:[#allocation9 + $0x50] sm:$0xf]
    %v796 = vld [vmem:[#allocation9 + $0x54] sm:$0xf]
    %v797 = vld [vmem:[#allocation9 + $0x58] sm:$0xf]
    %v798 = vld [vmem:[#allocation9 + $0x5c] sm:$0xf]
    %v799 = vld [vmem:[#allocation9 + $0x60] sm:$0xf]
    %v800 = vld [vmem:[#allocation9 + $0x64] sm:$0xf]
    %v801 = vld [vmem:[#allocation9 + $0x68] sm:$0xf]
    %v802 = vld [vmem:[#allocation9 + $0x6c] sm:$0xf]
    %v803 = vld [vmem:[#allocation9 + $0x70] sm:$0xf]
    %v804 = vld [vmem:[#allocation9 + $0x74] sm:$0xf]
    %v805 = vld [vmem:[#allocation9 + $0x78] sm:$0xf]
    %v806 = vld [vmem:[#allocation9 + $0x7c] sm:$0xf]
    %v839 = vunpack.c.l.b16 %v775
    %v840 = vunpack.c.l.b16 %v776
    %v841 = vunpack.c.l.b16 %v777
    %v842 = vunpack.c.l.b16 %v778
    %v843 = vunpack.c.l.b16 %v779
    %v844 = vunpack.c.l.b16 %v780
    %v845 = vunpack.c.l.b16 %v781
    %v846 = vunpack.c.l.b16 %v782
    %v847 = vunpack.c.l.b16 %v783
    %v848 = vunpack.c.l.b16 %v784
    %v849 = vunpack.c.l.b16 %v785
    %v850 = vunpack.c.l.b16 %v786
    %v851 = vunpack.c.l.b16 %v787
    %v852 = vunpack.c.l.b16 %v788
    %v853 = vunpack.c.l.b16 %v789
    %v854 = vunpack.c.l.b16 %v790
    %v855 = vunpack.c.l.b16 %v791
    %v856 = vunpack.c.l.b16 %v792
    %v857 = vunpack.c.l.b16 %v793
    %v858 = vunpack.c.l.b16 %v794
    %v859 = vunpack.c.l.b16 %v795
    %v860 = vunpack.c.l.b16 %v796
    %v861 = vunpack.c.l.b16 %v797
    %v862 = vunpack.c.l.b16 %v798
    %v863 = vunpack.c.l.b16 %v799
    %v864 = vunpack.c.l.b16 %v800
    %v865 = vunpack.c.l.b16 %v801
    %v866 = vunpack.c.l.b16 %v802
    %v867 = vunpack.c.l.b16 %v803
    %v868 = vunpack.c.l.b16 %v804
    %v869 = vunpack.c.l.b16 %v805
    %v870 = vunpack.c.l.b16 %v806
    %v871 = vpack.c.b16 %v840, %v839
    %v872 = vpack.c.b16 %v842, %v841
    %v873 = vpack.c.b16 %v844, %v843
    %v874 = vpack.c.b16 %v846, %v845
    %v875 = vpack.c.b16 %v848, %v847
    %v876 = vpack.c.b16 %v850, %v849
    %v877 = vpack.c.b16 %v852, %v851
    %v878 = vpack.c.b16 %v854, %v853
    %v879 = vpack.c.b16 %v856, %v855
    %v880 = vpack.c.b16 %v858, %v857
    %v881 = vpack.c.b16 %v860, %v859
    %v882 = vpack.c.b16 %v862, %v861
    %v883 = vpack.c.b16 %v864, %v863
    %v884 = vpack.c.b16 %v866, %v865
    %v885 = vpack.c.b16 %v868, %v867
    %v886 = vpack.c.b16 %v870, %v869
    %903 = vmatprep.subr.bf16.mxu0 0
    %904 = vmatpush1.bf16.msra.mxu0 %v871
    %905 = vmatprep.subr.bf16.mxu0 0
    %906 = vmatpush1.bf16.msra.mxu0 %v872
    %907 = vmatprep.subr.bf16.mxu0 0
    %908 = vmatpush1.bf16.msra.mxu0 %v873
    %909 = vmatprep.subr.bf16.mxu0 0
    %910 = vmatpush1.bf16.msra.mxu0 %v874
    %911 = vmatprep.subr.bf16.mxu0 0
    %912 = vmatpush1.bf16.msra.mxu0 %v875
    %913 = vmatprep.subr.bf16.mxu0 0
    %914 = vmatpush1.bf16.msra.mxu0 %v876
    %915 = vmatprep.subr.bf16.mxu0 0
    %916 = vmatpush1.bf16.msra.mxu0 %v877
    %917 = vmatprep.subr.bf16.mxu0 0
    %918 = vmatpush1.bf16.msra.mxu0 %v878
    %919 = vmatprep.subr.bf16.mxu0 0
    %920 = vmatpush1.bf16.msra.mxu0 %v879
    %921 = vmatprep.subr.bf16.mxu0 0
    %922 = vmatpush1.bf16.msra.mxu0 %v880
    %923 = vmatprep.subr.bf16.mxu0 0
    %924 = vmatpush1.bf16.msra.mxu0 %v881
    %925 = vmatprep.subr.bf16.mxu0 0
    %926 = vmatpush1.bf16.msra.mxu0 %v882
    %927 = vmatprep.subr.bf16.mxu0 0
    %928 = vmatpush1.bf16.msra.mxu0 %v883
    %929 = vmatprep.subr.bf16.mxu0 0
    %930 = vmatpush1.bf16.msra.mxu0 %v884
    %931 = vmatprep.subr.bf16.mxu0 0
    %932 = vmatpush1.bf16.msra.mxu0 %v885
    %933 = vmatprep.subr.bf16.mxu0 0
    %934 = vmatpush1.bf16.msra.mxu0 %v886
    %935 = vmatprep.mubr.bf16.mxu0 %v742
    %936 = vmatmul.mubr.bf16.gmra.mrb[0].mxu0 %v741
    %v937 = vpop.f32.mrb[0].mxu0
    %v938 = vadd.f32 0.0, %v937
    %v939 = vpop.f32.mrb[0].mxu0
    %v940 = vpop.f32.mrb[0].mxu0
    %v941 = vpop.f32.mrb[0].mxu0
    %942 = vdwg.mxu0
    %v975 = vunpack.c.l.b16 %v743
    %v976 = vunpack.c.l.b16 %v744
    %v977 = vunpack.c.l.b16 %v745
    %v978 = vunpack.c.l.b16 %v746
    %v979 = vunpack.c.l.b16 %v747
    %v980 = vunpack.c.l.b16 %v748
    %v981 = vunpack.c.l.b16 %v749
    %v982 = vunpack.c.l.b16 %v750
    %v983 = vunpack.c.l.b16 %v751
    %v984 = vunpack.c.l.b16 %v752
    %v985 = vunpack.c.l.b16 %v753
    %v986 = vunpack.c.l.b16 %v754
    %v987 = vunpack.c.l.b16 %v755
    %v988 = vunpack.c.l.b16 %v756
    %v989 = vunpack.c.l.b16 %v757
    %v990 = vunpack.c.l.b16 %v758
    %v991 = vunpack.c.l.b16 %v759
    %v992 = vunpack.c.l.b16 %v760
    %v993 = vunpack.c.l.b16 %v761
    %v994 = vunpack.c.l.b16 %v762
    %v995 = vunpack.c.l.b16 %v763
    %v996 = vunpack.c.l.b16 %v764
    %v997 = vunpack.c.l.b16 %v765
    %v998 = vunpack.c.l.b16 %v766
    %v999 = vunpack.c.l.b16 %v767
    %v1000 = vunpack.c.l.b16 %v768
    %v1001 = vunpack.c.l.b16 %v769
    %v1002 = vunpack.c.l.b16 %v770
    %v1003 = vunpack.c.l.b16 %v771
    %v1004 = vunpack.c.l.b16 %v772
    %v1005 = vunpack.c.l.b16 %v773
    %v1006 = vunpack.c.l.b16 %v774
    %v1007 = vpack.c.b16 %v976, %v975
    %v1008 = vpack.c.b16 %v978, %v977
    %v1009 = vpack.c.b16 %v980, %v979
    %v1010 = vpack.c.b16 %v982, %v981
    %v1011 = vpack.c.b16 %v984, %v983
    %v1012 = vpack.c.b16 %v986, %v985
    %v1013 = vpack.c.b16 %v988, %v987
    %v1014 = vpack.c.b16 %v990, %v989
    %v1015 = vpack.c.b16 %v992, %v991
    %v1016 = vpack.c.b16 %v994, %v993
    %v1017 = vpack.c.b16 %v996, %v995
    %v1018 = vpack.c.b16 %v998, %v997
    %v1019 = vpack.c.b16 %v1000, %v999
    %v1020 = vpack.c.b16 %v1002, %v1001
    %v1021 = vpack.c.b16 %v1004, %v1003
    %v1022 = vpack.c.b16 %v1006, %v1005
    %1039 = vmatprep.subr.bf16.mxu0 0
    %1040 = vmatpush1.bf16.msra.mxu0 %v1007
    %1041 = vmatprep.subr.bf16.mxu0 0
    %1042 = vmatpush1.bf16.msra.mxu0 %v1008
    %1043 = vmatprep.subr.bf16.mxu0 0
    %1044 = vmatpush1.bf16.msra.mxu0 %v1009
    %1045 = vmatprep.subr.bf16.mxu0 0
    %1046 = vmatpush1.bf16.msra.mxu0 %v1010
    %1047 = vmatprep.subr.bf16.mxu0 0
    %1048 = vmatpush1.bf16.msra.mxu0 %v1011
    %1049 = vmatprep.subr.bf16.mxu0 0
    %1050 = vmatpush1.bf16.msra.mxu0 %v1012
    %1051 = vmatprep.subr.bf16.mxu0 0
    %1052 = vmatpush1.bf16.msra.mxu0 %v1013
    %1053 = vmatprep.subr.bf16.mxu0 0
    %1054 = vmatpush1.bf16.msra.mxu0 %v1014
    %1055 = vmatprep.subr.bf16.mxu0 0
    %1056 = vmatpush1.bf16.msra.mxu0 %v1015
    %1057 = vmatprep.subr.bf16.mxu0 0
    %1058 = vmatpush1.bf16.msra.mxu0 %v1016
    %1059 = vmatprep.subr.bf16.mxu0 0
    %1060 = vmatpush1.bf16.msra.mxu0 %v1017
    %1061 = vmatprep.subr.bf16.mxu0 0
    %1062 = vmatpush1.bf16.msra.mxu0 %v1018
    %1063 = vmatprep.subr.bf16.mxu0 0
    %1064 = vmatpush1.bf16.msra.mxu0 %v1019
    %1065 = vmatprep.subr.bf16.mxu0 0
    %1066 = vmatpush1.bf16.msra.mxu0 %v1020
    %1067 = vmatprep.subr.bf16.mxu0 0
    %1068 = vmatpush1.bf16.msra.mxu0 %v1021
    %1069 = vmatprep.subr.bf16.mxu0 0
    %1070 = vmatpush1.bf16.msra.mxu0 %v1022
    %1071 = vmatprep.mubr.bf16.mxu0 %v738
    %1072 = vmatmul.mubr.bf16.gmra.mrb[0].mxu0 %v737
    %v1073 = vpop.f32.mrb[0].mxu0
    %v1074 = vadd.f32 %v938, %v1073
    %v1075 = vpop.f32.mrb[0].mxu0
    %v1076 = vpop.f32.mrb[0].mxu0
    %v1077 = vpop.f32.mrb[0].mxu0
    %1078 = vdwg.mxu0
    %v1079 = vld [vmem:[%s9] sm:$0x1]
    %v1081 = vlaneseq
    %v1082 = vshrl.u32 %v1081, 7
    %v1083 = vsub.s32 0, %v1082
    %v1084 = vrot.slane %v1079, %v1083
    %v1086 = vadd.f32 %v1074, %v1084
    %1087 = vst [vmem:[%s10] sm:$0xff] %v1086
    // Predicated region
    $region62: #{actor_critic_forward.1} parent=1 // pred_check
      _
    $region63: #{actor_critic_forward.1} parent=1 // pred_check_branch
      %1089 = sbr.rel (0) target = $region65
    $region64: #{actor_critic_forward.1} parent=1 // pred_region
      _
    $region65: #{actor_critic_forward.1} parent=1 // pred_fallthru
      _
    // Predicated region
    $region66: #{actor_critic_forward.1} parent=1 // pred_check
      _
    $region67: #{actor_critic_forward.1} parent=1 // pred_check_branch
      %1091 = sbr.rel (0) target = $region69
    $region68: #{actor_critic_forward.1} parent=1 // pred_region
      _
    $region69: #{actor_critic_forward.1} parent=1 // pred_fallthru
      _
    %1092 = vsyncpa [#allocation3], 1
    %1093 = vsyncpa [#allocation5], 1
    %1094 = vsyncpa [#allocation8], 1

</llo_original>
